<compile_context>
chip_gen: v5e
topology: v5e:2x2
jax: 0.10.0
libtpu: 0.0.40
codegen_flags: <defaults>
</compile_context>

<pallas_src>
import functools

import jax
import jax.numpy as jnp
from jax.experimental import pallas as pl
from jax.experimental.pallas import tpu as pltpu


_LANES = 128
_EPS = 1e-6


def _jaccard_partial_kernel(pred_ref, gt_ref, inter_ref, sum_ref,
                            inter_acc, sum_acc, *,
                            apply_sigmoid: bool,
                            n_valid: int,
                            block_rows: int,
                            rows_per_split: int,
                            needs_mask: bool):
    """Accumulate sum(p*g) and sum(p+g) for one (split, volume) pair.

    pred_ref/gt_ref : (1, block_rows, 128) tile of one flattened volume.
    inter_ref/sum_ref : (1, 1, 8, 128) output tiles (scalar broadcast).
    inter_acc/sum_acc : (block_rows, 128) f32 VMEM accumulators.
    """
    j = pl.program_id(2)

    @pl.when(j == 0)
    def _():
        inter_acc[...] = jnp.zeros_like(inter_acc)
        sum_acc[...] = jnp.zeros_like(sum_acc)

    # Native-dtype tiles streamed from HBM; cast to f32 on the VPU.
    p = pred_ref[0].astype(jnp.float32)            # (block_rows, 128)
    g = gt_ref[0].astype(jnp.float32)              # matches torch .float() on gt
    if apply_sigmoid:
        p = jax.nn.sigmoid(p)

    if needs_mask:
        s = pl.program_id(0)
        blk = s * rows_per_split + j               # global row-block index
        row0 = blk * block_rows
        block_fully_valid = (row0 + block_rows) * _LANES <= n_valid

        @pl.when(block_fully_valid)
        def _():
            # Steady state: no masking overhead.
            inter_acc[...] += p * g
            sum_acc[...] += p + g

        @pl.when(jnp.logical_not(block_fully_valid))
        def _():
            # Tail block (lane padding / partial row-block / phantom split
            # step): zero out everything past the true pixel count.
            full_rows = n_valid // _LANES
            rem = n_valid % _LANES
            row_idx = jax.lax.broadcasted_iota(jnp.int32, p.shape, 0) + row0
            lane_idx = jax.lax.broadcasted_iota(jnp.int32, p.shape, 1)
            valid = (row_idx < full_rows) | (
                (row_idx == full_rows) & (lane_idx < rem))
            pm = jnp.where(valid, p, 0.0)
            gm = jnp.where(valid, g, 0.0)
            inter_acc[...] += pm * gm
            sum_acc[...] += pm + gm
    else:
        # Hot loop: full-vreg elementwise ops only (no cross-lane reduce here).
        inter_acc[...] += p * g
        sum_acc[...] += p + g

    @pl.when(j == pl.num_programs(2) - 1)
    def _():
        inter_ref[...] = jnp.full(inter_ref.shape, jnp.sum(inter_acc[...]),
                                  dtype=jnp.float32)
        sum_ref[...] = jnp.full(sum_ref.shape, jnp.sum(sum_acc[...]),
                                dtype=jnp.float32)


def jaccard_loss(pred, gt, *, per_volume=False, apply_sigmoid=False,
                 vmem_budget_bytes=28 * 1024 * 1024):
    """Pallas TPU implementation of JaccardLoss.forward.

    pred, gt: (B, 1, H, W).  Returns (B,) if per_volume else (1,) float32.
    """
    assert pred.shape[1] == 1, "this loss works with a binary prediction"
    B = pred.shape[0]
    bs = B if per_volume else 1

    total = 1
    for d in pred.shape:
        total *= d
    n = total // bs                                # pixels per reduced row

    # --- glue: free reshape to sublane/lane-dense (bs, rows, 128) layout ---
    pred_f = pred.reshape(bs, -1)                  # keep native dtypes
    gt_f = gt.reshape(bs, -1)
    rows = pl.cdiv(n, _LANES)
    if n % _LANES != 0:
        # TODO(synk): only hit when H*W is not a multiple of 128; this pad is a
        # full HBM copy, but padded elements are masked out in-kernel so the
        # apply_sigmoid path stays correct.
        pad = rows * _LANES - n
        pred_f = jnp.pad(pred_f, ((0, 0), (0, pad)))
        gt_f = jnp.pad(gt_f, ((0, 0), (0, pad)))
    pred_2d = pred_f.reshape(bs, rows, _LANES)
    gt_2d = gt_f.reshape(bs, rows, _LANES)

    # --- block sizing: large, sublane-dense blocks sized against VMEM ---
    p_item = jnp.dtype(pred.dtype).itemsize
    g_item = jnp.dtype(gt.dtype).itemsize
    # 2 pipeline buffers per input + 2 f32 accumulators, per 128-lane row.
    bytes_per_row = _LANES * (2 * (p_item + g_item) + 2 * 4)
    max_rows = max(8, (vmem_budget_bytes // bytes_per_row) // 8 * 8)
    block_rows = rows if rows <= max_rows else max_rows
    grid_rows = pl.cdiv(rows, block_rows)

    # 2-way split of the row-block sequence for megacore (v7x); works for odd
    # block counts too (phantom step is DMA-clamped and masked to zero).
    n_split = 2 if grid_rows >= 2 else 1
    rows_per_split = pl.cdiv(grid_rows, n_split)

    needs_mask = (n_split * rows_per_split * block_rows * _LANES) != n

    kernel = functools.partial(
        _jaccard_partial_kernel,
        apply_sigmoid=apply_sigmoid,
        n_valid=n,
        block_rows=block_rows,
        rows_per_split=rows_per_split,
        needs_mask=needs_mask,
    )

    last_block = grid_rows - 1

    def in_idx(s, b, j):
        # Clamp so the phantom trailing step of an uneven split never issues
        # an out-of-bounds DMA; its contribution is masked to zero in-kernel.
        return (b, jnp.minimum(s * rows_per_split + j, last_block), 0)

    part_shape = jax.ShapeDtypeStruct((n_split, bs, 8, _LANES), jnp.float32)

    inter_p, sum_p = pl.pallas_call(
        kernel,
        out_shape=(part_shape, part_shape),
        grid_spec=pltpu.PrefetchScalarGridSpec(
            num_scalar_prefetch=0,
            grid=(n_split, bs, rows_per_split),
            in_specs=[
                pl.BlockSpec((1, block_rows, _LANES), in_idx),
                pl.BlockSpec((1, block_rows, _LANES), in_idx),
            ],
            out_specs=[
                pl.BlockSpec((1, 1, 8, _LANES), lambda s, b, j: (s, b, 0, 0)),
                pl.BlockSpec((1, 1, 8, _LANES), lambda s, b, j: (s, b, 0, 0)),
            ],
            scratch_shapes=[
                pltpu.VMEM((block_rows, _LANES), jnp.float32),
                pltpu.VMEM((block_rows, _LANES), jnp.float32),
            ],
        ),
        compiler_params=pltpu.CompilerParams(
            dimension_semantics=("parallel", "parallel", "arbitrary"),
            vmem_limit_bytes=48 * 1024 * 1024,
        ),
    )(pred_2d, gt_2d)

    # --- glue: O(bs)-sized epilogue (combine splits, form the loss) ---
    inter = jnp.sum(inter_p[:, :, 0, 0], axis=0)   # (bs,)
    psum = jnp.sum(sum_p[:, :, 0, 0], axis=0)      # (bs,)
    union = psum - inter
    return 1.0 - (inter + _EPS) / (union + _EPS)


def jaccard_loss_ref(pred, gt, *, per_volume=False, apply_sigmoid=False):
    """Pure-JAX reference mirroring the PyTorch forward."""
    if apply_sigmoid:
        pred = jax.nn.sigmoid(pred)
    bs = pred.shape[0] if per_volume else 1
    eps = 1e-6
    dg = gt.reshape(bs, -1).astype(jnp.float32)
    dp = pred.reshape(bs, -1).astype(jnp.float32)
    inter = jnp.sum(dp * dg, axis=1)
    union = jnp.sum(dp + dg, axis=1) - inter
    return 1.0 - (inter + eps) / (union + eps)


if __name__ == "__main__":
    key = jax.random.PRNGKey(0)

    # (shape, vmem budget override):
    #  * 16x16   : single block, no masking.
    #  * 10x10   : lane padding -> masked tail (covers the sigmoid path).
    #  * 63x64   : tiny budget -> multi-block grid, even 2-way megacore split,
    #              partial boundary block.
    #  * 48x128  : tiny budget -> odd block count, uneven split with a
    #              DMA-clamped phantom step.
    configs = [
        ((2, 1, 16, 16), None),
        ((2, 1, 10, 10), None),
        ((2, 1, 63, 64), 64 * 1024),
        ((1, 1, 48, 128), 64 * 1024),
    ]

    ok = True
    for idx, (shape, budget) in enumerate(configs):
        k1, k2 = jax.random.split(jax.random.fold_in(key, idx))
        pred = jax.random.uniform(k1, shape, dtype=jnp.float32)
        gt = (jax.random.uniform(k2, shape) > 0.5).astype(jnp.float32)
        for per_volume in (False, True):
            for apply_sigmoid in (False, True):
                kwargs = dict(per_volume=per_volume, apply_sigmoid=apply_sigmoid)
                if budget is not None:
                    out = jaccard_loss(pred, gt, vmem_budget_bytes=budget,
                                       **kwargs)
                else:
                    out = jaccard_loss(pred, gt, **kwargs)
                out = jax.block_until_ready(out)
                ref = jaccard_loss_ref(pred, gt, **kwargs)
                if out.shape != ref.shape or not jnp.allclose(
                        out, ref, atol=1e-5, rtol=1e-5):
                    ok = False

    if ok:
        print("KERNEL_OK")
</pallas_src>

<mosaic_0001>
module attributes {stable_mosaic.version = 11 : i64} {
  func.func @_jaccard_partial_kernel(%arg0: i32, %arg1: i32, %arg2: i32, %arg3: memref<1x4x128xf32, #tpu.memory_space<vmem>>, %arg4: memref<1x4x128xf32, #tpu.memory_space<vmem>>, %arg5: memref<1x1x8x128xf32, #tpu.memory_space<vmem>>, %arg6: memref<1x1x8x128xf32, #tpu.memory_space<vmem>>, %arg7: memref<4x128xf32, #tpu.memory_space<vmem>>, %arg8: memref<4x128xf32, #tpu.memory_space<vmem>>) attributes {dimension_semantics = [#tpu.dimension_semantics<parallel>, #tpu.dimension_semantics<parallel>, #tpu.dimension_semantics<arbitrary>], iteration_bounds = array<i64: 1, 1, 1>, scalar_prefetch = 0 : i64, scratch_operands = 2 : i64, tpu.core_type = #tpu.core_type<tc>, window_params = [{transform_indices = @transform_0, window_bounds = array<i64: 1, 4, 128>}, {transform_indices = @transform_1, window_bounds = array<i64: 1, 4, 128>}, {transform_indices = @transform_2, window_bounds = array<i64: 1, 1, 8, 128>}, {transform_indices = @transform_3, window_bounds = array<i64: 1, 1, 8, 128>}]} {
    %c0_i32 = arith.constant 0 : i32
    %0 = arith.cmpi eq, %arg2, %c0_i32 : i32
    %1 = arith.extui %0 : i1 to i32
    %c0_i32_0 = arith.constant 0 : i32
    %2 = arith.cmpi ne, %1, %c0_i32_0 : i32
    scf.if %2 {
      %cst = arith.constant 0.000000e+00 : f32
      %18 = vector.broadcast %cst : f32 to vector<4x128xf32>
      %c0_16 = arith.constant 0 : index
      %c0_17 = arith.constant 0 : index
      %19 = vector.load %arg7[%c0_16, %c0_17] : memref<4x128xf32, #tpu.memory_space<vmem>>, vector<4x128xf32>
      tpu.vector_store %arg7[%c0_16, %c0_17], %18 {strides = array<i32>} : memref<4x128xf32, #tpu.memory_space<vmem>>, vector<4x128xf32>,
      %cst_18 = arith.constant 0.000000e+00 : f32
      %20 = vector.broadcast %cst_18 : f32 to vector<4x128xf32>
      %c0_19 = arith.constant 0 : index
      %c0_20 = arith.constant 0 : index
      %21 = vector.load %arg8[%c0_19, %c0_20] : memref<4x128xf32, #tpu.memory_space<vmem>>, vector<4x128xf32>
      tpu.vector_store %arg8[%c0_19, %c0_20], %20 {strides = array<i32>} : memref<4x128xf32, #tpu.memory_space<vmem>>, vector<4x128xf32>,
    } else {
    }
    %c0 = arith.constant 0 : index
    %c0_1 = arith.constant 0 : index
    %c0_2 = arith.constant 0 : index
    %3 = vector.load %arg3[%c0, %c0_1, %c0_2] : memref<1x4x128xf32, #tpu.memory_space<vmem>>, vector<1x4x128xf32>
    %4 = vector.shape_cast %3 : vector<1x4x128xf32> to vector<4x128xf32>
    %c0_3 = arith.constant 0 : index
    %c0_4 = arith.constant 0 : index
    %c0_5 = arith.constant 0 : index
    %5 = vector.load %arg4[%c0_3, %c0_4, %c0_5] : memref<1x4x128xf32, #tpu.memory_space<vmem>>, vector<1x4x128xf32>
    %6 = vector.shape_cast %5 : vector<1x4x128xf32> to vector<4x128xf32>
    %c0_6 = arith.constant 0 : index
    %c0_7 = arith.constant 0 : index
    %7 = vector.load %arg7[%c0_6, %c0_7] : memref<4x128xf32, #tpu.memory_space<vmem>>, vector<4x128xf32>
    %8 = arith.mulf %4, %6 : vector<4x128xf32>
    %9 = arith.addf %7, %8 : vector<4x128xf32>
    %c0_8 = arith.constant 0 : index
    %c0_9 = arith.constant 0 : index
    %10 = vector.load %arg7[%c0_8, %c0_9] : memref<4x128xf32, #tpu.memory_space<vmem>>, vector<4x128xf32>
    tpu.vector_store %arg7[%c0_8, %c0_9], %9 {strides = array<i32>} : memref<4x128xf32, #tpu.memory_space<vmem>>, vector<4x128xf32>,
    %c0_10 = arith.constant 0 : index
    %c0_11 = arith.constant 0 : index
    %11 = vector.load %arg8[%c0_10, %c0_11] : memref<4x128xf32, #tpu.memory_space<vmem>>, vector<4x128xf32>
    %12 = arith.addf %4, %6 : vector<4x128xf32>
    %13 = arith.addf %11, %12 : vector<4x128xf32>
    %c0_12 = arith.constant 0 : index
    %c0_13 = arith.constant 0 : index
    %14 = vector.load %arg8[%c0_12, %c0_13] : memref<4x128xf32, #tpu.memory_space<vmem>>, vector<4x128xf32>
    tpu.vector_store %arg8[%c0_12, %c0_13], %13 {strides = array<i32>} : memref<4x128xf32, #tpu.memory_space<vmem>>, vector<4x128xf32>,
    %c0_i32_14 = arith.constant 0 : i32
    %15 = arith.cmpi eq, %arg2, %c0_i32_14 : i32
    %16 = arith.extui %15 : i1 to i32
    %c0_i32_15 = arith.constant 0 : i32
    %17 = arith.cmpi ne, %16, %c0_i32_15 : i32
    scf.if %17 {
      %c0_16 = arith.constant 0 : index
      %c0_17 = arith.constant 0 : index
      %18 = vector.load %arg7[%c0_16, %c0_17] : memref<4x128xf32, #tpu.memory_space<vmem>>, vector<4x128xf32>
      %19 = vector.shape_cast %18 : vector<4x128xf32> to vector<1x4x128xf32>
      %cst = arith.constant dense<0.000000e+00> : vector<1xf32>
      %20 = vector.multi_reduction <add>, %19, %cst [1, 2] : vector<1x4x128xf32> to vector<1xf32>
      %21 = vector.shape_cast %20 : vector<1xf32> to vector<1x1x1xf32>
      %22 = vector.extract %21[0, 0, 0] : f32 from vector<1x1x1xf32>
      %23 = vector.broadcast %22 : f32 to vector<1x1x8x128xf32>
      %c0_18 = arith.constant 0 : index
      %c0_19 = arith.constant 0 : index
      %c0_20 = arith.constant 0 : index
      %c0_21 = arith.constant 0 : index
      %24 = vector.load %arg5[%c0_18, %c0_19, %c0_20, %c0_21] : memref<1x1x8x128xf32, #tpu.memory_space<vmem>>, vector<1x1x8x128xf32>
      tpu.vector_store %arg5[%c0_18, %c0_19, %c0_20, %c0_21], %23 {strides = array<i32>} : memref<1x1x8x128xf32, #tpu.memory_space<vmem>>, vector<1x1x8x128xf32>,
      %c0_22 = arith.constant 0 : index
      %c0_23 = arith.constant 0 : index
      %25 = vector.load %arg8[%c0_22, %c0_23] : memref<4x128xf32, #tpu.memory_space<vmem>>, vector<4x128xf32>
      %26 = vector.shape_cast %25 : vector<4x128xf32> to vector<1x4x128xf32>
      %cst_24 = arith.constant dense<0.000000e+00> : vector<1xf32>
      %27 = vector.multi_reduction <add>, %26, %cst_24 [1, 2] : vector<1x4x128xf32> to vector<1xf32>
      %28 = vector.shape_cast %27 : vector<1xf32> to vector<1x1x1xf32>
      %29 = vector.extract %28[0, 0, 0] : f32 from vector<1x1x1xf32>
      %30 = vector.broadcast %29 : f32 to vector<1x1x8x128xf32>
      %c0_25 = arith.constant 0 : index
      %c0_26 = arith.constant 0 : index
      %c0_27 = arith.constant 0 : index
      %c0_28 = arith.constant 0 : index
      %31 = vector.load %arg6[%c0_25, %c0_26, %c0_27, %c0_28] : memref<1x1x8x128xf32, #tpu.memory_space<vmem>>, vector<1x1x8x128xf32>
      tpu.vector_store %arg6[%c0_25, %c0_26, %c0_27, %c0_28], %30 {strides = array<i32>} : memref<1x1x8x128xf32, #tpu.memory_space<vmem>>, vector<1x1x8x128xf32>,
    } else {
    }
    return
  }
  func.func @transform_0(%arg0: i32, %arg1: i32, %arg2: i32) -> (i32, i32, i32) {
    %c1_i32 = arith.constant 1 : i32
    %0 = arith.muli %arg0, %c1_i32 : i32
    %1 = arith.addi %0, %arg2 : i32
    %c0_i32 = arith.constant 0 : i32
    %2 = arith.minsi %1, %c0_i32 : i32
    %c0_i32_0 = arith.constant 0 : i32
    %c0_i32_1 = arith.constant 0 : i32
    return %arg1, %2, %c0_i32_0 : i32, i32, i32
  }
  func.func @transform_1(%arg0: i32, %arg1: i32, %arg2: i32) -> (i32, i32, i32) {
    %c1_i32 = arith.constant 1 : i32
    %0 = arith.muli %arg0, %c1_i32 : i32
    %1 = arith.addi %0, %arg2 : i32
    %c0_i32 = arith.constant 0 : i32
    %2 = arith.minsi %1, %c0_i32 : i32
    %c0_i32_0 = arith.constant 0 : i32
    %c0_i32_1 = arith.constant 0 : i32
    return %arg1, %2, %c0_i32_0 : i32, i32, i32
  }
  func.func @transform_2(%arg0: i32, %arg1: i32, %arg2: i32) -> (i32, i32, i32, i32) {
    %c0_i32 = arith.constant 0 : i32
    %c0_i32_0 = arith.constant 0 : i32
    %c0_i32_1 = arith.constant 0 : i32
    return %arg0, %arg1, %c0_i32, %c0_i32_0 : i32, i32, i32, i32
  }
  func.func @transform_3(%arg0: i32, %arg1: i32, %arg2: i32) -> (i32, i32, i32, i32) {
    %c0_i32 = arith.constant 0 : i32
    %c0_i32_0 = arith.constant 0 : i32
    %c0_i32_1 = arith.constant 0 : i32
    return %arg0, %arg1, %c0_i32, %c0_i32_0 : i32, i32, i32, i32
  }
}

</mosaic_0001>

<llo_original>
// kernel: tpu_custom_call.1
$region0: #{tpu_custom_call.1}
  #allocation0 [shape = 'u32[]', space=smem, size = 0x4, offset = 0x4, fixed_abs, tag = 'smem constant byte address 0x4 - core index']
  #allocation1 [shape = 'u32[72,128]{1,0:T(1,128)}', space=vmem, size = 0x9000, scoped, tag = 'internal scratch']
  #allocation2 [shape = 'f32[4,128]{1,0:T(4,128)}', space=vmem, size = 0x800, scoped, tag = 'scratch operand']
  #allocation3 [shape = 'f32[4,128]{1,0:T(4,128)}', space=vmem, size = 0x800, scoped, tag = 'scratch operand']
  %s0 = inlined_call_operand.hbm [shape: f32[1,4,128], index: 0, kind: input, shape index: {}]
  %s1 = inlined_call_operand.hbm [shape: f32[1,4,128], index: 1, kind: input, shape index: {}]
  %s2 = inlined_call_operand.hbm [shape: f32[1,1,8,128], index: 2, kind: output, shape index: {0}]
  %s3 = inlined_call_operand.hbm [shape: f32[1,1,8,128], index: 3, kind: output, shape index: {1}]
  %4 = xla_tuple %s2, %s3
  %s5 = sld [smem:[#allocation0]]
  $region42: #{tpu_custom_call.1} parent=0
    _
  %s7 = ssub.s32 1, %s5
  %s8 = scalar_select 0, %s7, %s5
  $region1: #{tpu_custom_call.1} parent=0
    #allocation4 [shape = 'u8[2048]{0}', space=vmem, size = 0x800, scoped, tag = 'input window, operand 0, single buffered']
    #allocation5 [shape = 's32[1]{0}', space=sflag, size = 0x4, scoped, tag = 'scoped memory for tpu_custom_call.1']
    #allocation6 [shape = 's32[1]{0}', space=sflag, size = 0x4, scoped, tag = 'scoped memory for tpu_custom_call.1']
    #allocation7 [shape = 'u8[2048]{0}', space=vmem, size = 0x800, scoped, tag = 'input window, operand 1, single buffered']
    #allocation8 [shape = 's32[1]{0}', space=sflag, size = 0x4, scoped, tag = 'scoped memory for tpu_custom_call.1']
    #allocation9 [shape = 'u8[4096]{0}', space=vmem, size = 0x1000, scoped, tag = 'output window, operand 0, single buffered']
    #allocation10 [shape = 'u8[4096]{0}', space=vmem, size = 0x1000, scoped, tag = 'output window, operand 1, single buffered']
    #allocation11 [shape = 's32[1]{0}', space=sflag, size = 0x4, scoped, tag = 'scoped memory for tpu_custom_call.1']
    %9 = vsyncpa [#allocation5], 0
    %10 = vsyncpa [#allocation8], 0
    %11 = vsyncpa [#allocation6], 0
    %12 = vsyncpa [#allocation11], 0
    // Predicated region
    $region2: #{tpu_custom_call.1} parent=1 // pred_check
      _
    $region3: #{tpu_custom_call.1} parent=1 // pred_check_branch
      %14 = sbr.rel (0) target = $region5
    $region4: #{tpu_custom_call.1} parent=1 // pred_region
      %s15 = sadd.s32 0, 0
      %p16 = scmp.lt.s32.totalorder %s15, 0
      %s17 = scalar_select %p16, %s15, 0
      %19 = vsyncadd [#allocation5], 0
      %s20 = smul.addr %s17, 4
      %s21 = scalar_lea.hbm %s0, %s20
      %s23 = sshll.u32 %s21, 4
      %s24 = int_to_ptr.hbm [resolvable:$true] %s23
      %s25 = sshll.u32 [#allocation4], 4
      %s26 = int_to_ptr.vmem [resolvable:$true] %s25
      %28 = dma.hbm_to_vmem [thread:$0]  %s24, 64, %s26, [#allocation5]
    $region5: #{tpu_custom_call.1} parent=1 // pred_fallthru
      _
    // Predicated region
    $region6: #{tpu_custom_call.1} parent=1 // pred_check
      _
    $region7: #{tpu_custom_call.1} parent=1 // pred_check_branch
      %30 = sbr.rel (0) target = $region9
    $region8: #{tpu_custom_call.1} parent=1 // pred_region
      %s31 = sadd.s32 0, 0
      %p32 = scmp.lt.s32.totalorder %s31, 0
      %s33 = scalar_select %p32, %s31, 0
      %35 = vsyncadd [#allocation8], 0
      %s36 = smul.addr %s33, 4
      %s37 = scalar_lea.hbm %s1, %s36
      %s39 = sshll.u32 %s37, 4
      %s40 = int_to_ptr.hbm [resolvable:$true] %s39
      %s41 = sshll.u32 [#allocation7], 4
      %s42 = int_to_ptr.vmem [resolvable:$true] %s41
      %44 = dma.hbm_to_vmem [thread:$0]  %s40, 64, %s42, [#allocation8]
    $region9: #{tpu_custom_call.1} parent=1 // pred_fallthru
      _
    // Predicated region
    $region10: #{tpu_custom_call.1} parent=1 // pred_check
      _
    $region11: #{tpu_custom_call.1} parent=1 // pred_check_branch
      %46 = sbr.rel (0) target = $region13
    $region12: #{tpu_custom_call.1} parent=1 // pred_region
      %48 = dma.done [#allocation5], 64
    $region13: #{tpu_custom_call.1} parent=1 // pred_fallthru
      _
    // Predicated region
    $region14: #{tpu_custom_call.1} parent=1 // pred_check
      _
    $region15: #{tpu_custom_call.1} parent=1 // pred_check_branch
      %50 = sbr.rel (0) target = $region17
    $region16: #{tpu_custom_call.1} parent=1 // pred_region
      %52 = dma.done [#allocation8], 64
    $region17: #{tpu_custom_call.1} parent=1 // pred_fallthru
      _
    %s53 = sadd.s32 0, 0
    %p54 = scmp.lt.s32.totalorder %s53, 0
    %s55 = scalar_select %p54, %s53, 0
    %s56 = sadd.s32 0, 0
    %p57 = scmp.lt.s32.totalorder %s56, 0
    %s58 = scalar_select %p57, %s56, 0
    %p59 = scmp.eq.s32.totalorder 0, 0
    // Predicated region
    $region18: #{tpu_custom_call.1} parent=1 // pred_check
      %p60 = pneg %p59
    $region19: #{tpu_custom_call.1} parent=1 // pred_check_branch
      %62 = sbr.rel (%p60) target = $region21
    $region20: #{tpu_custom_call.1} parent=1 // pred_region
      %63 = vst [vmem:[#allocation2] sm:$0xf] 0.0
      %64 = vst [vmem:[#allocation3] sm:$0xf] 0.0
    $region21: #{tpu_custom_call.1} parent=1 // pred_fallthru
      _
    %v65 = vld [vmem:[#allocation4] sm:$0xf]
    %v66 = vld [vmem:[#allocation7] sm:$0xf]
    %v67 = vld [vmem:[#allocation2] sm:$0xf]
    %v68 = vmul.f32 %v65, %v66
    %v69 = vadd.f32 %v67, %v68
    %70 = vst [vmem:[#allocation2] sm:$0xf] %v69
    %v71 = vld [vmem:[#allocation3] sm:$0xf]
    %v72 = vadd.f32 %v65, %v66
    %v73 = vadd.f32 %v71, %v72
    %74 = vst [vmem:[#allocation3] sm:$0xf] %v73
    // Predicated region
    $region22: #{tpu_custom_call.1} parent=1 // pred_check
      %p75 = pneg %p59
    $region23: #{tpu_custom_call.1} parent=1 // pred_check_branch
      %77 = sbr.rel (%p75) target = $region25
    $region24: #{tpu_custom_call.1} parent=1 // pred_region
      %v78 = vld [vmem:[#allocation2] sm:$0xf]
      %vm79 = vcmask 1043456
      %v80 = vsel %vm79, %v78, 0.0
      %81 = vadd.xlane.f32.xlu0 %v80
      %v82 = vpop.xlane.xlu0 %81
      %v83 = vrot.slane %v82, 4
      %v84 = vadd.f32 %v82, %v83
      %v85 = vrot.slane %v84, 2
      %v86 = vadd.f32 %v84, %v85
      %v87 = vrot.slane %v86, 1
      %v88 = vadd.f32 %v86, %v87
      %s89 = vtos %v88
      %v90 = vstv %s89
      %91 = vst [vmem:[#allocation9] sm:$0xff] %v90
      %v92 = vld [vmem:[#allocation3] sm:$0xf]
      %v93 = vsel %vm79, %v92, 0.0
      %94 = vadd.xlane.f32.xlu0 %v93
      %v95 = vpop.xlane.xlu0 %94
      %v96 = vrot.slane %v95, 4
      %v97 = vadd.f32 %v95, %v96
      %v98 = vrot.slane %v97, 2
      %v99 = vadd.f32 %v97, %v98
      %v100 = vrot.slane %v99, 1
      %v101 = vadd.f32 %v99, %v100
      %s102 = vtos %v101
      %v103 = vstv %s102
      %104 = vst [vmem:[#allocation10] sm:$0xff] %v103
    $region25: #{tpu_custom_call.1} parent=1 // pred_fallthru
      _
    // Predicated region
    $region26: #{tpu_custom_call.1} parent=1 // pred_check
      _
    $region27: #{tpu_custom_call.1} parent=1 // pred_check_branch
      %106 = sbr.rel (0) target = $region29
    $region28: #{tpu_custom_call.1} parent=1 // pred_region
      %108 = vsyncadd [#allocation6], 0
      %s110 = sshll.u32 [#allocation9], 4
      %s111 = int_to_ptr.vmem [resolvable:$true] %s110
      %s112 = sshll.u32 %s2, 4
      %s113 = int_to_ptr.hbm [resolvable:$true] %s112
      %115 = dma.vmem_to_hbm [thread:$0]  %s111, 128, %s113, [#allocation6]
    $region29: #{tpu_custom_call.1} parent=1 // pred_fallthru
      _
    // Predicated region
    $region30: #{tpu_custom_call.1} parent=1 // pred_check
      _
    $region31: #{tpu_custom_call.1} parent=1 // pred_check_branch
      %117 = sbr.rel (0) target = $region33
    $region32: #{tpu_custom_call.1} parent=1 // pred_region
      %119 = vsyncadd [#allocation11], 0
      %s121 = sshll.u32 [#allocation10], 4
      %s122 = int_to_ptr.vmem [resolvable:$true] %s121
      %s123 = sshll.u32 %s3, 4
      %s124 = int_to_ptr.hbm [resolvable:$true] %s123
      %126 = dma.vmem_to_hbm [thread:$0]  %s122, 128, %s124, [#allocation11]
    $region33: #{tpu_custom_call.1} parent=1 // pred_fallthru
      _
    // Predicated region
    $region34: #{tpu_custom_call.1} parent=1 // pred_check
      _
    $region35: #{tpu_custom_call.1} parent=1 // pred_check_branch
      %128 = sbr.rel (0) target = $region37
    $region36: #{tpu_custom_call.1} parent=1 // pred_region
      %130 = dma.done [#allocation6], 128
    $region37: #{tpu_custom_call.1} parent=1 // pred_fallthru
      _
    // Predicated region
    $region38: #{tpu_custom_call.1} parent=1 // pred_check
      _
    $region39: #{tpu_custom_call.1} parent=1 // pred_check_branch
      %132 = sbr.rel (0) target = $region41
    $region40: #{tpu_custom_call.1} parent=1 // pred_region
      %134 = dma.done [#allocation11], 128
    $region41: #{tpu_custom_call.1} parent=1 // pred_fallthru
      _
    %135 = vsyncpa [#allocation5], 1
    %136 = vsyncpa [#allocation8], 1
    %137 = vsyncpa [#allocation6], 1
    %138 = vsyncpa [#allocation11], 1

</llo_original>
